<compile_context>
chip_gen: v5e
topology: v5e:2x2
jax: 0.10.0
libtpu: 0.0.40
codegen_flags: <defaults>
</compile_context>

<pallas_src>
import jax
import jax.numpy as jnp
from jax import lax
from jax.experimental import pallas as pl
from jax.experimental.pallas import tpu as pltpu


_MAX_BLOCK_N = 2048                        # rows per tile (review: 512-2048)
_INPUT_PIPELINE_BUDGET = 32 * 1024 * 1024  # bytes for 2 inputs x 2 pipeline buffers


def _score_kernel(q_ref, c_ref, o_ref):
    """Row-wise L2-normalized dot product + sigmoid on one tile.

    q_ref: (bq, H) VMEM tile, bq in {1, block_n}
    c_ref: (bc, H) VMEM tile, bc in {1, block_n}
    o_ref: (block_n, 1) f32 scores
    """
    q = q_ref[...].astype(jnp.float32)
    c = c_ref[...].astype(jnp.float32)

    # (q/||q||) . (c/||c||) == sum(q*c) * rsqrt(sum(q*q) * sum(c*c))
    # Per-row rsqrt (EUP) instead of 2*block_n*H per-element divides (VALU),
    # and no large normalized intermediates -> ~half the vreg pressure.
    dot = jnp.sum(q * c, axis=-1, keepdims=True)
    qq = jnp.sum(q * q, axis=-1, keepdims=True)
    cc = jnp.sum(c * c, axis=-1, keepdims=True)
    s = dot * lax.rsqrt(qq * cc)

    # Exact sigmoid via tanh (EUP), no VALU divide: sigmoid(x) = 0.5*(tanh(x/2)+1).
    o_ref[...] = 0.5 * (jnp.tanh(0.5 * s) + 1.0)


def _pick_block_n(n, bytes_per_row_both_inputs):
    """Largest row tile such that 2 inputs x 2 pipeline buffers fit the VMEM budget."""
    blk = _INPUT_PIPELINE_BUDGET // max(1, 2 * bytes_per_row_both_inputs)
    blk = min(_MAX_BLOCK_N, int(blk))
    blk = max(8, (blk // 8) * 8)  # sublane alignment for partial-N tiling
    if n <= blk:
        return n                  # single block; block dims equal full array dims
    return blk


def _paired_scores(q, c, block_n=None):
    """q: [Nq, H], c: [Nc, H] with max(Nq, Nc) = N and the other side either N or 1.

    Returns scores [N] = sigmoid(<q_i/||q_i||, c_i/||c_i||>), broadcasting a
    singleton side across the other without materializing it in HBM.
    """
    nq, H = q.shape
    nc, Hc = c.shape
    assert H == Hc
    n = max(nq, nc)

    if block_n is None:
        bytes_per_row = H * (q.dtype.itemsize + c.dtype.itemsize)
        block_n = _pick_block_n(n, bytes_per_row)
    grid = (pl.cdiv(n, block_n),)

    def spec_for(rows):
        if rows == n:
            # Blocked along rows, full hidden dim per tile.
            return pl.BlockSpec((block_n, H), lambda i: (i, 0)), block_n
        # Singleton side: a single (1, H) block reused for every grid step.
        return pl.BlockSpec((1, H), lambda i: (0, 0)), 1

    q_spec, bq = spec_for(nq)
    c_spec, bc = spec_for(nc)

    # Scoped-VMEM limit: double-buffered inputs + outputs + headroom, capped at
    # 48 MiB (within v7x's 64 MiB physical VMEM; well under v5e/v6e's 128 MiB).
    pipeline_bytes = 2 * (bq * H * q.dtype.itemsize
                          + bc * H * c.dtype.itemsize
                          + block_n * 4)
    vmem_limit = int(min(max(pipeline_bytes + (8 << 20), 32 << 20), 48 << 20))

    out = pl.pallas_call(
        _score_kernel,
        out_shape=jax.ShapeDtypeStruct((n, 1), jnp.float32),
        grid_spec=pltpu.PrefetchScalarGridSpec(
            num_scalar_prefetch=0,
            grid=grid,
            in_specs=[q_spec, c_spec],
            out_specs=pl.BlockSpec((block_n, 1), lambda i: (i, 0)),
        ),
        compiler_params=pltpu.CompilerParams(
            # On v7x (2 TensorCores) this shards the row grid across cores.
            dimension_semantics=("parallel",),
            vmem_limit_bytes=vmem_limit,
        ),
    )(q, c)
    return out[:, 0]


def bi_encoder_score(query_encs, cand_encs, block_n=None):
    """Reproduces BiEncoderScorer.forward / score_candidates semantics.

    query_encs: 1-D [H] or 2-D [Nq, H]
    cand_encs:  1-D [H] or 2-D [Nc, H]
    Returns 1-D scores (sigmoid of L2-normalized dot products).
    Inputs may be f32 or bf16; bf16 is kept through HBM->VMEM and upcast in-kernel.
    """
    q = query_encs
    c = cand_encs
    if q.ndim > 2:
        raise ValueError("query_encs must be 1-D or 2-D")
    if c.ndim > 2:
        raise ValueError("cand_encs must be 1-D or 2-D")
    if q.ndim == 1:
        q = q[None, :]
    if c.ndim == 1:
        c = c[None, :]
    nq, hq = q.shape
    nc, hc = c.shape
    if hq != hc:
        raise ValueError("hidden dims must match")
    if nq > 1 and nc > 1 and nq != nc:
        raise ValueError(
            "nb_queries and nb_cands must match if both tensors are 2D")
    # Singleton sides are handled inside the kernel via a reused (1, H) block;
    # normalizing a single row with torch.norm(x) equals the row-wise norm, so
    # semantics are preserved.
    return _paired_scores(q, c, block_n=block_n)


if __name__ == "__main__":
    key = jax.random.PRNGKey(0)
    kq, kc = jax.random.split(key)
    N, H = 8, 128  # small shapes: 8 query/candidate pairs, hidden dim 128
    query_encs = jax.random.normal(kq, (N, H), dtype=jnp.float32)
    cand_encs = jax.random.normal(kc, (N, H), dtype=jnp.float32)

    def ref_scores(qr, cr):
        qr = qr.astype(jnp.float32)
        cr = cr.astype(jnp.float32)
        qn = qr / jnp.linalg.norm(qr, axis=1, keepdims=True)
        cn = cr / jnp.linalg.norm(cr, axis=1, keepdims=True)
        return jax.nn.sigmoid(jnp.sum(qn * cn, axis=1))

    # paired (N x N) case
    scores = bi_encoder_score(query_encs, cand_encs)
    scores = jax.block_until_ready(scores)
    ref = ref_scores(query_encs, cand_encs)
    assert scores.shape == (N,)
    assert jnp.allclose(scores, ref, atol=1e-5), (scores, ref)

    # single query (1-D) vs many candidates
    single_scores = bi_encoder_score(query_encs[0], cand_encs)
    single_scores = jax.block_until_ready(single_scores)
    ref1 = ref_scores(query_encs[:1], cand_encs)
    assert single_scores.shape == (N,)
    assert jnp.allclose(single_scores, ref1, atol=1e-5), (single_scores, ref1)

    # bf16 encodings pass through (HBM traffic halved; f32 accumulation in-kernel)
    q_bf16 = query_encs.astype(jnp.bfloat16)
    c_bf16 = cand_encs.astype(jnp.bfloat16)
    bf16_scores = bi_encoder_score(q_bf16, c_bf16)
    bf16_scores = jax.block_until_ready(bf16_scores)
    ref_bf16 = ref_scores(q_bf16, c_bf16)
    assert jnp.allclose(bf16_scores, ref_bf16, atol=1e-4), (bf16_scores, ref_bf16)

    print("KERNEL_OK")
</pallas_src>

<mosaic_0001>
module attributes {stable_mosaic.version = 11 : i64} {
  func.func @_score_kernel(%arg0: i32, %arg1: memref<8x128xf32, #tpu.memory_space<vmem>>, %arg2: memref<8x128xf32, #tpu.memory_space<vmem>>, %arg3: memref<8x1xf32, #tpu.memory_space<vmem>>) attributes {dimension_semantics = [#tpu.dimension_semantics<parallel>], iteration_bounds = array<i64: 1>, scalar_prefetch = 0 : i64, scratch_operands = 0 : i64, tpu.core_type = #tpu.core_type<tc>, window_params = [{transform_indices = @transform_0, window_bounds = array<i64: 8, 128>}, {transform_indices = @transform_1, window_bounds = array<i64: 8, 128>}, {transform_indices = @transform_2, window_bounds = array<i64: 8, 1>}]} {
    %c0 = arith.constant 0 : index
    %c0_0 = arith.constant 0 : index
    %0 = vector.load %arg1[%c0, %c0_0] : memref<8x128xf32, #tpu.memory_space<vmem>>, vector<8x128xf32>
    %c0_1 = arith.constant 0 : index
    %c0_2 = arith.constant 0 : index
    %1 = vector.load %arg2[%c0_1, %c0_2] : memref<8x128xf32, #tpu.memory_space<vmem>>, vector<8x128xf32>
    %2 = arith.mulf %0, %1 : vector<8x128xf32>
    %cst = arith.constant dense<0.000000e+00> : vector<8xf32>
    %3 = vector.multi_reduction <add>, %2, %cst [1] : vector<8x128xf32> to vector<8xf32>
    %4 = vector.shape_cast %3 : vector<8xf32> to vector<8x1xf32>
    %5 = arith.mulf %0, %0 : vector<8x128xf32>
    %cst_3 = arith.constant dense<0.000000e+00> : vector<8xf32>
    %6 = vector.multi_reduction <add>, %5, %cst_3 [1] : vector<8x128xf32> to vector<8xf32>
    %7 = vector.shape_cast %6 : vector<8xf32> to vector<8x1xf32>
    %8 = arith.mulf %1, %1 : vector<8x128xf32>
    %cst_4 = arith.constant dense<0.000000e+00> : vector<8xf32>
    %9 = vector.multi_reduction <add>, %8, %cst_4 [1] : vector<8x128xf32> to vector<8xf32>
    %10 = vector.shape_cast %9 : vector<8xf32> to vector<8x1xf32>
    %11 = arith.mulf %7, %10 : vector<8x1xf32>
    %12 = math.rsqrt %11 : vector<8x1xf32>
    %13 = arith.mulf %4, %12 : vector<8x1xf32>
    %cst_5 = arith.constant 5.000000e-01 : f32
    %14 = vector.broadcast %cst_5 : f32 to vector<8x1xf32>
    %15 = arith.mulf %14, %13 : vector<8x1xf32>
    %16 = math.tanh %15 : vector<8x1xf32>
    %cst_6 = arith.constant 1.000000e+00 : f32
    %17 = vector.broadcast %cst_6 : f32 to vector<8x1xf32>
    %18 = arith.addf %16, %17 : vector<8x1xf32>
    %cst_7 = arith.constant 5.000000e-01 : f32
    %19 = vector.broadcast %cst_7 : f32 to vector<8x1xf32>
    %20 = arith.mulf %19, %18 : vector<8x1xf32>
    %c0_8 = arith.constant 0 : index
    %c0_9 = arith.constant 0 : index
    %21 = vector.load %arg3[%c0_8, %c0_9] : memref<8x1xf32, #tpu.memory_space<vmem>>, vector<8x1xf32>
    tpu.vector_store %arg3[%c0_8, %c0_9], %20 {strides = array<i32>} : memref<8x1xf32, #tpu.memory_space<vmem>>, vector<8x1xf32>,
    return
  }
  func.func @transform_0(%arg0: i32) -> (i32, i32) {
    %c0_i32 = arith.constant 0 : i32
    %c0_i32_0 = arith.constant 0 : i32
    return %arg0, %c0_i32 : i32, i32
  }
  func.func @transform_1(%arg0: i32) -> (i32, i32) {
    %c0_i32 = arith.constant 0 : i32
    %c0_i32_0 = arith.constant 0 : i32
    return %arg0, %c0_i32 : i32, i32
  }
  func.func @transform_2(%arg0: i32) -> (i32, i32) {
    %c0_i32 = arith.constant 0 : i32
    %c0_i32_0 = arith.constant 0 : i32
    return %arg0, %c0_i32 : i32, i32
  }
}

</mosaic_0001>

<llo_original>
// kernel: tpu_custom_call.1
$region0: #{tpu_custom_call.1}
  #allocation0 [shape = 'u32[]', space=smem, size = 0x4, offset = 0x4, fixed_abs, tag = 'smem constant byte address 0x4 - core index']
  #allocation1 [shape = 'u32[72,128]{1,0:T(1,128)}', space=vmem, size = 0x9000, scoped, tag = 'internal scratch']
  %s0 = inlined_call_operand.hbm [shape: f32[8,128], index: 0, kind: input, shape index: {}]
  %s1 = inlined_call_operand.hbm [shape: f32[8,128], index: 1, kind: input, shape index: {}]
  %s2 = inlined_call_operand.vmem [shape: f32[8,1], index: 2, kind: output, shape index: {}]
  %s3 = sld [smem:[#allocation0]]
  $region26: #{tpu_custom_call.1} parent=0
    _
  %s5 = ssub.s32 1, %s3
  %s6 = scalar_select 0, %s5, %s3
  $region1: #{tpu_custom_call.1} parent=0
    #allocation2 [shape = 'u8[4096]{0}', space=vmem, size = 0x1000, scoped, tag = 'input window, operand 0, single buffered']
    #allocation3 [shape = 's32[1]{0}', space=sflag, size = 0x4, scoped, tag = 'scoped memory for tpu_custom_call.1']
    #allocation4 [shape = 'u8[4096]{0}', space=vmem, size = 0x1000, scoped, tag = 'input window, operand 1, single buffered']
    #allocation5 [shape = 's32[1]{0}', space=sflag, size = 0x4, scoped, tag = 'scoped memory for tpu_custom_call.1']
    %7 = vsyncpa [#allocation3], 0
    %8 = vsyncpa [#allocation5], 0
    // Predicated region
    $region2: #{tpu_custom_call.1} parent=1 // pred_check
      _
    $region3: #{tpu_custom_call.1} parent=1 // pred_check_branch
      %10 = sbr.rel (0) target = $region5
    $region4: #{tpu_custom_call.1} parent=1 // pred_region
      %12 = vsyncadd [#allocation3], 0
      %s14 = sshll.u32 %s0, 4
      %s15 = int_to_ptr.hbm [resolvable:$true] %s14
      %s16 = sshll.u32 [#allocation2], 4
      %s17 = int_to_ptr.vmem [resolvable:$true] %s16
      %19 = dma.hbm_to_vmem [thread:$0]  %s15, 128, %s17, [#allocation3]
    $region5: #{tpu_custom_call.1} parent=1 // pred_fallthru
      _
    // Predicated region
    $region6: #{tpu_custom_call.1} parent=1 // pred_check
      _
    $region7: #{tpu_custom_call.1} parent=1 // pred_check_branch
      %21 = sbr.rel (0) target = $region9
    $region8: #{tpu_custom_call.1} parent=1 // pred_region
      %23 = vsyncadd [#allocation5], 0
      %s25 = sshll.u32 %s1, 4
      %s26 = int_to_ptr.hbm [resolvable:$true] %s25
      %s27 = sshll.u32 [#allocation4], 4
      %s28 = int_to_ptr.vmem [resolvable:$true] %s27
      %30 = dma.hbm_to_vmem [thread:$0]  %s26, 128, %s28, [#allocation5]
    $region9: #{tpu_custom_call.1} parent=1 // pred_fallthru
      _
    // Predicated region
    $region10: #{tpu_custom_call.1} parent=1 // pred_check
      _
    $region11: #{tpu_custom_call.1} parent=1 // pred_check_branch
      %32 = sbr.rel (0) target = $region13
    $region12: #{tpu_custom_call.1} parent=1 // pred_region
      %34 = dma.done [#allocation3], 128
    $region13: #{tpu_custom_call.1} parent=1 // pred_fallthru
      _
    // Predicated region
    $region14: #{tpu_custom_call.1} parent=1 // pred_check
      _
    $region15: #{tpu_custom_call.1} parent=1 // pred_check_branch
      %36 = sbr.rel (0) target = $region17
    $region16: #{tpu_custom_call.1} parent=1 // pred_region
      %38 = dma.done [#allocation5], 128
    $region17: #{tpu_custom_call.1} parent=1 // pred_fallthru
      _
    %v39 = vld [vmem:[#allocation2] sm:$0xff]
    %v40 = vld [vmem:[#allocation4] sm:$0xff]
    %v41 = vmul.f32 %v39, %v40
    %42 = vadd.xlane.f32.xlu0 %v41
    %v43 = vpop.xlane.xlu0 %42
    %v44 = vmul.f32 %v39, %v39
    %45 = vadd.xlane.f32.xlu0 %v44
    %v46 = vpop.xlane.xlu0 %45
    %v47 = vmul.f32 %v40, %v40
    %48 = vadd.xlane.f32.xlu0 %v47
    %v49 = vpop.xlane.xlu0 %48
    %v50 = vmul.f32 %v46, %v49
    %v51 = vrsqrt.pop %v50
    %v52 = vmul.f32 %v51, %v50
    %v53 = vmul.f32 %v52, %v51
    %v54 = vmul.f32 0.5, %v53
    %v55 = vsub.f32 1.5, %v54
    %v56 = vmul.f32 %v51, %v55
    %vm57 = vweird.f32 %v50
    %vm58 = vweird.f32 %v51
    %vm59 = vmor %vm57, %vm58
    %v60 = vsel %vm59, %v51, %v56
    %v61 = vmul.f32 %v43, %v60
    %v62 = vmul.f32 %v61, 0.5
    %v63 = vtanh.pop %v62
    %v64 = vadd.f32 %v63, 1.0
    %v65 = vmul.f32 %v64, 0.5
    %vm66 = vcmask 7168
    %67 = vst.msk [vmem:[%s2] sm:$0xff] %vm66, %v65
    // Predicated region
    $region18: #{tpu_custom_call.1} parent=1 // pred_check
      _
    $region19: #{tpu_custom_call.1} parent=1 // pred_check_branch
      %69 = sbr.rel (0) target = $region21
    $region20: #{tpu_custom_call.1} parent=1 // pred_region
      _
    $region21: #{tpu_custom_call.1} parent=1 // pred_fallthru
      _
    // Predicated region
    $region22: #{tpu_custom_call.1} parent=1 // pred_check
      _
    $region23: #{tpu_custom_call.1} parent=1 // pred_check_branch
      %71 = sbr.rel (0) target = $region25
    $region24: #{tpu_custom_call.1} parent=1 // pred_region
      _
    $region25: #{tpu_custom_call.1} parent=1 // pred_fallthru
      _
    %72 = vsyncpa [#allocation3], 1
    %73 = vsyncpa [#allocation5], 1

</llo_original>
